<compile_context>
chip_gen: v6e
topology: v6e:2x2x1
jax: 0.10.0
libtpu: 0.0.40
codegen_flags: <defaults>
</compile_context>

<pallas_src>
import functools

import jax
import jax.numpy as jnp
import numpy as np
from jax.experimental import pallas as pl
from jax.experimental.pallas import tpu as pltpu


def _round_up(a, m):
    return (a + m - 1) // m * m


def _pick_token_tile(T):
    """Token tile for the fused projection kernel.

    Large problems get 512-row tiles (multiple of 256 -> fills the v6e/v7x MXU rows;
    a 512xK bf16 patch block + 512xD_pad output block is well under a few MiB, so
    double-buffering fits every generation's VMEM including v7x's 64 MiB).
    Mid-size problems are split into two tiles so v7x's two TensorCores both get a
    "parallel" grid step; tiny problems use a single tile.
    """
    if T >= 1024:
        return 512
    if T > 512:
        return _round_up(-(-T // 2), 256)
    if T >= 64:
        return _round_up(-(-T // 2), 16)
    return _round_up(max(T, 16), 16)


def _proj_ln_kernel(p_ref, w_ref, b_ref, g_ref, bb_ref, o_ref, *, eps, d_real, d_pad):
    """Fused patch projection (MXU matmul) + bias + LayerNorm for one token tile.

    p_ref : (tm, K)      flattened visible patches (bf16); K kept dense in HBM.
    w_ref : (K, D_pad)   projection weight (bf16), resident across the grid.
    b_ref : (1, D_pad)   projection bias (f32); zero in padded columns.
    g_ref : (1, D_pad)   LayerNorm gamma (f32); zero in padded columns.
    bb_ref: (1, D_pad)   LayerNorm beta  (f32); zero in padded columns.
    o_ref : (tm, D_pad)  output tokens (lane-dense store: D_pad % 128 == 0).

    LayerNorm statistics are taken over the d_real real columns only; padded weight /
    bias columns are zero, so sums over all columns equal sums over the real ones.
    """
    x = p_ref[...]                                           # (tm, K) bf16
    w = w_ref[...]                                           # (K, D_pad) bf16
    y = jnp.dot(x, w, preferred_element_type=jnp.float32)    # MXU, f32 accumulate
    y = y + b_ref[...]
    mu = jnp.sum(y, axis=-1, keepdims=True) * (1.0 / d_real)
    yc = y - mu
    ssq = jnp.sum(yc * yc, axis=-1, keepdims=True)
    if d_pad != d_real:                                      # drop padded-column term
        ssq = ssq - float(d_pad - d_real) * mu * mu
    inv = jax.lax.rsqrt(ssq * (1.0 / d_real) + eps)          # EUP rsqrt
    o_ref[...] = (yc * inv * g_ref[...] + bb_ref[...]).astype(o_ref.dtype)


def _proj_ln_pallas(patches, w_mat, bias, gamma, beta, *, eps, out_dtype):
    """patches: (T, K) bf16 -> (T, D) = LayerNorm(patches @ w_mat + bias)."""
    T, K = patches.shape
    D = w_mat.shape[1]

    # Pad only the tiny per-feature params so the output / weight blocks are lane-dense.
    D_pad = _round_up(D, 128)
    if D_pad != D:
        w_mat = jnp.pad(w_mat, ((0, 0), (0, D_pad - D)))
        bias = jnp.pad(bias, ((0, 0), (0, D_pad - D)))
        gamma = jnp.pad(gamma, ((0, 0), (0, D_pad - D)))
        beta = jnp.pad(beta, ((0, 0), (0, D_pad - D)))

    tm = _pick_token_tile(T)
    T_pad = _round_up(T, tm)
    if T_pad != T:
        patches = jnp.pad(patches, ((0, T_pad - T), (0, 0)))

    kernel = functools.partial(_proj_ln_kernel, eps=eps, d_real=D, d_pad=D_pad)
    out = pl.pallas_call(
        kernel,
        out_shape=jax.ShapeDtypeStruct((T_pad, D_pad), out_dtype),
        grid_spec=pltpu.PrefetchScalarGridSpec(
            num_scalar_prefetch=0,
            grid=(T_pad // tm,),
            in_specs=[
                pl.BlockSpec((tm, K), lambda i: (i, 0)),       # streaming patches
                pl.BlockSpec((K, D_pad), lambda i: (0, 0)),    # resident weight
                pl.BlockSpec((1, D_pad), lambda i: (0, 0)),
                pl.BlockSpec((1, D_pad), lambda i: (0, 0)),
                pl.BlockSpec((1, D_pad), lambda i: (0, 0)),
            ],
            out_specs=pl.BlockSpec((tm, D_pad), lambda i: (i, 0)),
        ),
        compiler_params=pltpu.CompilerParams(
            dimension_semantics=("parallel",)),
    )(patches, w_mat, bias, gamma, beta)
    return out[:T, :D]


def sparse_patch_embed_forward(x, indexes, mask, H, W, params, patch_size, eps=1e-5):
    """SparsePatchEmbed.forward.

    x        : (B, N, Cin)  visible fine-grid tokens
    indexes  : (B, N) int32 flattened positions of the tokens on the H*W grid,
               row-major sorted per batch element
    mask     : (1, H*W)     {0,1} visibility mask (patch-aligned, shared over batch)
    params   : proj_w (D, Cin, p, p) torch Conv2d layout, proj_b (D,), ln_g (D,), ln_b (D,)
    returns  : (tokens (B, Nv, D), (Hp, Wp), mask_new (1, Hp*Wp) bool, coords_new (1, Nv, 2))
    """
    B, N, Cin = x.shape
    p = patch_size
    Hp, Wp = H // p, W // p
    D = params["proj_w"].shape[0]
    K = Cin * p * p
    Nv = N // (p * p)          # visible coarse patches (mask is patch-aligned)

    # --- coarse-grid mask / coords bookkeeping (tiny, stays in XLA) ---
    mask_new = (mask.reshape(Hp, p, Wp, p).sum(axis=(1, 3)) > 0).reshape(1, -1)
    # NOTE: assumes exactly Nv coarse patches are visible (the torch module asserts the
    # mask is patch-aligned); nonzero(size=Nv) would silently pad with 0 otherwise.
    vis_new = jnp.nonzero(mask_new[0], size=Nv)[0]                    # (Nv,)
    yy, xx = jnp.meshgrid(jnp.arange(Hp), jnp.arange(Wp), indexing="ij")
    coords = jnp.stack([yy, xx], axis=-1).reshape(-1, 2)
    coords_new = coords[vis_new][None]                                # (1, Nv, 2)

    # --- build per-patch rows directly from the sparse tokens (no dense H*W map) ---
    hy, wx = vis_new // Wp, vis_new % Wp
    dy = jnp.arange(p)
    dx = jnp.arange(p)
    rows = hy[:, None, None] * p + dy[None, :, None]                  # (Nv, p, 1)
    cols = wx[:, None, None] * p + dx[None, None, :]                  # (Nv, 1, p)
    pos = (rows * W + cols).reshape(-1).astype(indexes.dtype)         # (Nv*p*p,)
    # `indexes` is sorted, so searchsorted maps each grid position to its token slot
    # (silently wrong only if the patch-aligned-mask assumption is violated).
    gidx = jax.vmap(lambda idx: jnp.searchsorted(idx, pos))(indexes)  # (B, Nv*p*p)

    x_bf16 = x.astype(jnp.bfloat16)          # cast once; gather/reshape move bf16 bytes
    patches = x_bf16[jnp.arange(B)[:, None], gidx]                    # (B, Nv*p*p, Cin)
    # Pure reshape (no activation transpose): token-axis flatten (B*Nv) and a
    # (dy, dx, c)-major K axis.  The layout permute is applied to the weight instead.
    patches = patches.reshape(B * Nv, K)

    # torch Conv2d weight (D, Cin, p, p) -> (D, p, p, Cin) -> (K, D) with rows in the
    # same (dy, dx, c) order as the patch flatten above.
    w_mat = params["proj_w"].transpose(0, 2, 3, 1).reshape(D, K).T.astype(jnp.bfloat16)
    bias = params["proj_b"].reshape(1, D).astype(jnp.float32)
    gamma = params["ln_g"].reshape(1, D).astype(jnp.float32)
    beta = params["ln_b"].reshape(1, D).astype(jnp.float32)

    tokens = _proj_ln_pallas(patches, w_mat, bias, gamma, beta,
                             eps=eps, out_dtype=x.dtype)
    tokens = tokens.reshape(B, Nv, D)
    return tokens, (Hp, Wp), mask_new, coords_new


def _reference_forward(x, indexes, mask, H, W, params, p, eps=1e-5):
    """Dense scatter -> stride-p conv -> gather -> LayerNorm reference (pure JAX)."""
    B, N, Cin = x.shape
    Hp, Wp = H // p, W // p
    Nv = N // (p * p)
    dense = jnp.zeros((B, H * W, Cin), jnp.float32)
    dense = dense.at[jnp.arange(B)[:, None], indexes].set(x.astype(jnp.float32))
    dense = dense.reshape(B, Hp, p, Wp, p, Cin)
    out = jnp.einsum("bhiwjc,dcij->bhwd", dense, params["proj_w"],
                     precision=jax.lax.Precision.HIGHEST) + params["proj_b"]
    out = out.reshape(B, Hp * Wp, -1)
    mask_new = (mask.reshape(Hp, p, Wp, p).sum(axis=(1, 3)) > 0).reshape(-1)
    vis = jnp.nonzero(mask_new, size=Nv)[0]
    out = out[:, vis]
    mu = out.mean(-1, keepdims=True)
    var = ((out - mu) ** 2).mean(-1, keepdims=True)
    return (out - mu) * jax.lax.rsqrt(var + eps) * params["ln_g"] + params["ln_b"]


def _run_case(key, D):
    k_x, k_w, k_b, k_g, k_bb, k_m = jax.random.split(key, 6)

    B, Cin, H, W = 2, 3, 32, 32
    p = 4                         # patch_size
    Hp, Wp = H // p, W // p
    n_vis = 16                    # visible coarse patches (25%)
    N = n_vis * p * p             # visible fine-grid tokens

    # patch-aligned visibility mask, shared over the batch (as the torch module assumes)
    coarse_ids = jax.random.permutation(k_m, Hp * Wp)[:n_vis]
    coarse_mask = jnp.zeros((Hp * Wp,), jnp.float32).at[coarse_ids].set(1.0)
    mask = jnp.broadcast_to(coarse_mask.reshape(Hp, 1, Wp, 1),
                            (Hp, p, Wp, p)).reshape(1, H * W)

    # visible fine-grid positions, row-major sorted, same for every batch element
    vis_pos = jnp.nonzero(mask[0] > 0, size=N)[0].astype(jnp.int32)
    indexes = jnp.broadcast_to(vis_pos[None, :], (B, N))

    x = jax.random.normal(k_x, (B, N, Cin), jnp.float32)
    params = dict(
        proj_w=0.1 * jax.random.normal(k_w, (D, Cin, p, p), jnp.float32),
        proj_b=0.1 * jax.random.normal(k_b, (D,), jnp.float32),
        ln_g=1.0 + 0.1 * jax.random.normal(k_g, (D,), jnp.float32),
        ln_b=0.1 * jax.random.normal(k_bb, (D,), jnp.float32),
    )

    tokens, (Hp_o, Wp_o), mask_new, coords_new = sparse_patch_embed_forward(
        x, indexes, mask, H, W, params, patch_size=p)
    jax.block_until_ready(tokens)

    assert tokens.shape == (B, n_vis, D)
    assert (Hp_o, Wp_o) == (Hp, Wp)
    assert mask_new.shape == (1, Hp * Wp)
    assert coords_new.shape == (1, n_vis, 2)

    ref = _reference_forward(x, indexes, mask, H, W, params, p)
    np.testing.assert_allclose(np.asarray(tokens), np.asarray(ref),
                               rtol=5e-2, atol=5e-2)   # bf16 operands vs f32 reference


if __name__ == "__main__":
    key = jax.random.PRNGKey(0)
    k1, k2 = jax.random.split(key)
    _run_case(k1, D=128)   # lane-dense embed dim (no D padding in the kernel)
    _run_case(k2, D=64)    # Twins stage-1 embed dim -> exercises the D -> 128 pad path
    print("KERNEL_OK")
</pallas_src>

<mosaic_0001>
module attributes {stable_mosaic.version = 11 : i64} {
  func.func @_proj_ln_kernel(%arg0: i32, %arg1: memref<32x48xbf16, #tpu.memory_space<vmem>>, %arg2: memref<48x128xbf16, #tpu.memory_space<vmem>>, %arg3: memref<1x128xf32, #tpu.memory_space<vmem>>, %arg4: memref<1x128xf32, #tpu.memory_space<vmem>>, %arg5: memref<1x128xf32, #tpu.memory_space<vmem>>, %arg6: memref<32x128xf32, #tpu.memory_space<vmem>>) attributes {dimension_semantics = [#tpu.dimension_semantics<parallel>], iteration_bounds = array<i64: 1>, scalar_prefetch = 0 : i64, scratch_operands = 0 : i64, tpu.core_type = #tpu.core_type<tc>, window_params = [{transform_indices = @transform_0, window_bounds = array<i64: 32, 48>}, {pipeline_mode = #tpu.pipeline_mode<synchronous>, transform_indices = @transform_1, window_bounds = array<i64: 48, 128>}, {pipeline_mode = #tpu.pipeline_mode<synchronous>, transform_indices = @transform_2, window_bounds = array<i64: 1, 128>}, {pipeline_mode = #tpu.pipeline_mode<synchronous>, transform_indices = @transform_3, window_bounds = array<i64: 1, 128>}, {pipeline_mode = #tpu.pipeline_mode<synchronous>, transform_indices = @transform_4, window_bounds = array<i64: 1, 128>}, {transform_indices = @transform_5, window_bounds = array<i64: 32, 128>}]} {
    %c0 = arith.constant 0 : index
    %c0_0 = arith.constant 0 : index
    %0 = vector.load %arg1[%c0, %c0_0] : memref<32x48xbf16, #tpu.memory_space<vmem>>, vector<32x48xbf16>
    %c0_1 = arith.constant 0 : index
    %c0_2 = arith.constant 0 : index
    %1 = vector.load %arg2[%c0_1, %c0_2] : memref<48x128xbf16, #tpu.memory_space<vmem>>, vector<48x128xbf16>
    %cst = arith.constant dense<0.000000e+00> : vector<32x128xf32>
    %2 = tpu.matmul %0, %1, %cst {dimension_numbers = #tpu.dot_dimension_numbers<[1], [0], [0], [1], [0, 0, 1, 1], [], []>} : vector<32x48xbf16>, vector<48x128xbf16>, vector<32x128xf32> -> vector<32x128xf32>
    %c0_3 = arith.constant 0 : index
    %c0_4 = arith.constant 0 : index
    %3 = vector.load %arg3[%c0_3, %c0_4] : memref<1x128xf32, #tpu.memory_space<vmem>>, vector<1x128xf32>
    %4 = vector.broadcast %3 : vector<1x128xf32> to vector<32x128xf32>
    %5 = arith.addf %2, %4 : vector<32x128xf32>
    %cst_5 = arith.constant dense<0.000000e+00> : vector<32xf32>
    %6 = vector.multi_reduction <add>, %5, %cst_5 [1] : vector<32x128xf32> to vector<32xf32>
    %7 = vector.shape_cast %6 : vector<32xf32> to vector<32x1xf32>
    %cst_6 = arith.constant 7.812500e-03 : f32
    %8 = vector.broadcast %cst_6 : f32 to vector<32x1xf32>
    %9 = arith.mulf %7, %8 : vector<32x1xf32>
    %10 = vector.broadcast %9 : vector<32x1xf32> to vector<32x128xf32>
    %11 = arith.subf %5, %10 : vector<32x128xf32>
    %12 = arith.mulf %11, %11 : vector<32x128xf32>
    %cst_7 = arith.constant dense<0.000000e+00> : vector<32xf32>
    %13 = vector.multi_reduction <add>, %12, %cst_7 [1] : vector<32x128xf32> to vector<32xf32>
    %14 = vector.shape_cast %13 : vector<32xf32> to vector<32x1xf32>
    %cst_8 = arith.constant 7.812500e-03 : f32
    %15 = vector.broadcast %cst_8 : f32 to vector<32x1xf32>
    %16 = arith.mulf %14, %15 : vector<32x1xf32>
    %cst_9 = arith.constant 9.99999974E-6 : f32
    %17 = vector.broadcast %cst_9 : f32 to vector<32x1xf32>
    %18 = arith.addf %16, %17 : vector<32x1xf32>
    %19 = math.rsqrt %18 : vector<32x1xf32>
    %20 = vector.broadcast %19 : vector<32x1xf32> to vector<32x128xf32>
    %21 = arith.mulf %11, %20 : vector<32x128xf32>
    %c0_10 = arith.constant 0 : index
    %c0_11 = arith.constant 0 : index
    %22 = vector.load %arg4[%c0_10, %c0_11] : memref<1x128xf32, #tpu.memory_space<vmem>>, vector<1x128xf32>
    %23 = vector.broadcast %22 : vector<1x128xf32> to vector<32x128xf32>
    %24 = arith.mulf %21, %23 : vector<32x128xf32>
    %c0_12 = arith.constant 0 : index
    %c0_13 = arith.constant 0 : index
    %25 = vector.load %arg5[%c0_12, %c0_13] : memref<1x128xf32, #tpu.memory_space<vmem>>, vector<1x128xf32>
    %26 = vector.broadcast %25 : vector<1x128xf32> to vector<32x128xf32>
    %27 = arith.addf %24, %26 : vector<32x128xf32>
    %c0_14 = arith.constant 0 : index
    %c0_15 = arith.constant 0 : index
    %28 = vector.load %arg6[%c0_14, %c0_15] : memref<32x128xf32, #tpu.memory_space<vmem>>, vector<32x128xf32>
    tpu.vector_store %arg6[%c0_14, %c0_15], %27 {strides = array<i32>} : memref<32x128xf32, #tpu.memory_space<vmem>>, vector<32x128xf32>,
    return
  }
  func.func @transform_0(%arg0: i32) -> (i32, i32) {
    %c0_i32 = arith.constant 0 : i32
    %c0_i32_0 = arith.constant 0 : i32
    return %arg0, %c0_i32 : i32, i32
  }
  func.func @transform_1(%arg0: i32) -> (i32, i32) {
    %c0_i32 = arith.constant 0 : i32
    %c0_i32_0 = arith.constant 0 : i32
    %c0_i32_1 = arith.constant 0 : i32
    return %c0_i32, %c0_i32_0 : i32, i32
  }
  func.func @transform_2(%arg0: i32) -> (i32, i32) {
    %c0_i32 = arith.constant 0 : i32
    %c0_i32_0 = arith.constant 0 : i32
    %c0_i32_1 = arith.constant 0 : i32
    return %c0_i32, %c0_i32_0 : i32, i32
  }
  func.func @transform_3(%arg0: i32) -> (i32, i32) {
    %c0_i32 = arith.constant 0 : i32
    %c0_i32_0 = arith.constant 0 : i32
    %c0_i32_1 = arith.constant 0 : i32
    return %c0_i32, %c0_i32_0 : i32, i32
  }
  func.func @transform_4(%arg0: i32) -> (i32, i32) {
    %c0_i32 = arith.constant 0 : i32
    %c0_i32_0 = arith.constant 0 : i32
    %c0_i32_1 = arith.constant 0 : i32
    return %c0_i32, %c0_i32_0 : i32, i32
  }
  func.func @transform_5(%arg0: i32) -> (i32, i32) {
    %c0_i32 = arith.constant 0 : i32
    %c0_i32_0 = arith.constant 0 : i32
    return %arg0, %c0_i32 : i32, i32
  }
}

</mosaic_0001>

<llo_original>
// kernel: tpu_custom_call.1
$region0: #{tpu_custom_call.1}
  #allocation0 [shape = 'u32[]', space=smem, size = 0x4, offset = 0x4, fixed_abs, tag = 'smem constant byte address 0x4 - core index']
  #allocation1 [shape = 'u32[144,128]{1,0:T(1,128)}', space=vmem, size = 0x12000, scoped, tag = 'internal scratch']
  %s0 = inlined_call_operand.hbm [shape: bf16[32,48], index: 0, kind: input, shape index: {}]
  %s1 = inlined_call_operand.hbm [shape: bf16[48,128], index: 1, kind: input, shape index: {}]
  %s2 = inlined_call_operand.vmem [shape: f32[1,128], index: 2, kind: input, shape index: {}]
  %s3 = inlined_call_operand.vmem [shape: f32[1,128], index: 3, kind: input, shape index: {}]
  %s4 = inlined_call_operand.vmem [shape: f32[1,128], index: 4, kind: input, shape index: {}]
  %s5 = inlined_call_operand.hbm [shape: f32[32,128], index: 5, kind: output, shape index: {}]
  %s6 = sld [smem:[#allocation0]]
  $region38: #{tpu_custom_call.1} parent=0
    _
  %s8 = ssub.s32 1, %s6
  %s9 = scalar_select 0, %s8, %s6
  $region1: #{tpu_custom_call.1} parent=0
    #allocation2 [shape = 'u8[8192]{0}', space=vmem, size = 0x2000, scoped, tag = 'input window, operand 0, single buffered']
    #allocation3 [shape = 's32[1]{0}', space=sflag, size = 0x4, scoped, tag = 'scoped memory for tpu_custom_call.1']
    #allocation4 [shape = 's32[1]{0}', space=sflag, size = 0x4, scoped, tag = 'scoped memory for tpu_custom_call.1']
    #allocation5 [shape = 'u8[12288]{0}', space=vmem, size = 0x3000, scoped, tag = 'input window, operand 1, single buffered']
    #allocation6 [shape = 's32[1]{0}', space=sflag, size = 0x4, scoped, tag = 'scoped memory for tpu_custom_call.1']
    #allocation7 [shape = 'u8[16384]{0}', space=vmem, size = 0x4000, scoped, tag = 'output window, operand 0, single buffered']
    %10 = vsyncpa [#allocation3], 0
    %11 = vsyncpa [#allocation6], 0
    %12 = vsyncpa [#allocation4], 0
    // Predicated region
    $region2: #{tpu_custom_call.1} parent=1 // pred_check
      _
    $region3: #{tpu_custom_call.1} parent=1 // pred_check_branch
      %14 = sbr.rel (0) target = $region5
    $region4: #{tpu_custom_call.1} parent=1 // pred_region
      %s16 = ssub.s32 256, 256
      %17 = vsyncadd [#allocation3], %s16
      %s18 = sshll.u32 [#allocation2], 4
      %s19 = int_to_ptr.vmem [resolvable:$true] %s18
      %24 = dma.hbm_to_vmem [thread:$0]  %s0, 256, %s19, [#allocation3], 64, 64, 4
    $region5: #{tpu_custom_call.1} parent=1 // pred_fallthru
      _
    // Predicated region
    $region6: #{tpu_custom_call.1} parent=1 // pred_check
      _
    $region7: #{tpu_custom_call.1} parent=1 // pred_check_branch
      %26 = sbr.rel (0) target = $region9
    $region8: #{tpu_custom_call.1} parent=1 // pred_region
      %s28 = ssub.s32 384, 384
      %29 = vsyncadd [#allocation6], %s28
      %s30 = sshll.u32 [#allocation5], 4
      %s31 = int_to_ptr.vmem [resolvable:$true] %s30
      %36 = dma.hbm_to_vmem [thread:$0]  %s1, 384, %s31, [#allocation6], 64, 64, 4
    $region9: #{tpu_custom_call.1} parent=1 // pred_fallthru
      _
    // Predicated region
    $region10: #{tpu_custom_call.1} parent=1 // pred_check
      _
    $region11: #{tpu_custom_call.1} parent=1 // pred_check_branch
      %38 = sbr.rel (0) target = $region13
    $region12: #{tpu_custom_call.1} parent=1 // pred_region
      _
    $region13: #{tpu_custom_call.1} parent=1 // pred_fallthru
      _
    // Predicated region
    $region14: #{tpu_custom_call.1} parent=1 // pred_check
      _
    $region15: #{tpu_custom_call.1} parent=1 // pred_check_branch
      %40 = sbr.rel (0) target = $region17
    $region16: #{tpu_custom_call.1} parent=1 // pred_region
      _
    $region17: #{tpu_custom_call.1} parent=1 // pred_fallthru
      _
    // Predicated region
    $region18: #{tpu_custom_call.1} parent=1 // pred_check
      _
    $region19: #{tpu_custom_call.1} parent=1 // pred_check_branch
      %42 = sbr.rel (0) target = $region21
    $region20: #{tpu_custom_call.1} parent=1 // pred_region
      _
    $region21: #{tpu_custom_call.1} parent=1 // pred_fallthru
      _
    // Predicated region
    $region22: #{tpu_custom_call.1} parent=1 // pred_check
      _
    $region23: #{tpu_custom_call.1} parent=1 // pred_check_branch
      %44 = sbr.rel (0) target = $region25
    $region24: #{tpu_custom_call.1} parent=1 // pred_region
      %45 = dma.done [#allocation3], 256
    $region25: #{tpu_custom_call.1} parent=1 // pred_fallthru
      _
    // Predicated region
    $region26: #{tpu_custom_call.1} parent=1 // pred_check
      _
    $region27: #{tpu_custom_call.1} parent=1 // pred_check_branch
      %47 = sbr.rel (0) target = $region29
    $region28: #{tpu_custom_call.1} parent=1 // pred_region
      %48 = dma.done [#allocation6], 384
    $region29: #{tpu_custom_call.1} parent=1 // pred_fallthru
      _
    %v50 = vld [vmem:[#allocation2] sm:$0xf]
    %v51 = vld [vmem:[#allocation2 + $0x4] sm:$0xf]
    %v52 = vld [vmem:[#allocation2 + $0x8] sm:$0xf]
    %v53 = vld [vmem:[#allocation2 + $0xc] sm:$0xf]
    %v54 = vld [vmem:[#allocation5] sm:$0xf]
    %v55 = vld [vmem:[#allocation5 + $0x4] sm:$0xf]
    %v56 = vld [vmem:[#allocation5 + $0x8] sm:$0xf]
    %v57 = vld [vmem:[#allocation5 + $0xc] sm:$0xf]
    %v58 = vld [vmem:[#allocation5 + $0x10] sm:$0xf]
    %v59 = vld [vmem:[#allocation5 + $0x14] sm:$0xf]
    %v60 = vld [vmem:[%s2] sm:$0x1]
    %v62 = vlaneseq
    %v63 = vshrl.u32 %v62, 7
    %v64 = vsub.s32 0, %v63
    %v65 = vrot.slane %v60, %v64
    %v71 = vunpack.c.l.b16 %v50
    %v72 = vunpack.c.l.b16 %v51
    %v73 = vunpack.c.l.b16 %v52
    %v74 = vunpack.c.l.b16 %v53
    %v75 = vpack.c.b16 %v72, %v71
    %v76 = vpack.c.b16 %v74, %v73
    %v83 = vunpack.c.l.b16 %v54
    %v84 = vunpack.c.l.b16 %v55
    %v85 = vunpack.c.l.b16 %v56
    %v86 = vunpack.c.l.b16 %v57
    %v87 = vunpack.c.l.b16 %v58
    %v88 = vunpack.c.l.b16 %v59
    %v89 = vpack.c.b16 %v84, %v83
    %v90 = vpack.c.b16 %v86, %v85
    %v91 = vpack.c.b16 %v88, %v87
    %vm95 = vcmask 392192
    %v97 = vsel %vm95, %v75, 0
    %v100 = vsel %vm95, %v76, 0
    %102 = vmatprep.subr.bf16.mxu0 0
    %103 = vmatpush1.bf16.msra.mxu0 0
    %104 = vmatprep.subr.bf16.mxu0 0
    %105 = vmatpush1.bf16.msra.mxu0 0
    %106 = vmatprep.subr.bf16.mxu0 0
    %107 = vmatpush1.bf16.msra.mxu0 0
    %108 = vmatprep.subr.bf16.mxu0 0
    %109 = vmatpush1.bf16.msra.mxu0 0
    %110 = vmatprep.subr.bf16.mxu0 0
    %111 = vmatpush1.bf16.msra.mxu0 0
    %112 = vmatprep.subr.bf16.mxu0 0
    %113 = vmatpush1.bf16.msra.mxu0 %v91
    %114 = vmatprep.subr.bf16.mxu0 0
    %115 = vmatpush1.bf16.msra.mxu0 %v90
    %116 = vmatprep.subr.bf16.mxu0 0
    %117 = vmatpush1.bf16.msra.mxu0 %v89
    %118 = vmatprep.subr.bf16.mxu0 0
    %119 = vmatpush2.bf16.msra.mxu0 0
    %120 = vmatprep.subr.bf16.mxu0 0
    %121 = vmatpush2.bf16.msra.mxu0 0
    %122 = vmatprep.subr.bf16.mxu0 0
    %123 = vmatpush2.bf16.msra.mxu0 0
    %124 = vmatprep.subr.bf16.mxu0 0
    %125 = vmatpush2.bf16.msra.mxu0 0
    %126 = vmatprep.subr.bf16.mxu0 0
    %127 = vmatpush2.bf16.msra.mxu0 0
    %128 = vmatprep.subr.bf16.mxu0 0
    %129 = vmatpush2.bf16.msra.mxu0 0
    %130 = vmatprep.subr.bf16.mxu0 0
    %131 = vmatpush2.bf16.msra.mxu0 0
    %132 = vmatprep.subr.bf16.mxu0 0
    %133 = vmatpush2.bf16.msra.mxu0 0
    %134 = vmatprep.mubr.bf16.mxu0 0
    %135 = vmatmul.mubr.bf16.gmra.mxu0 %v97
    %v136 = vpop.f32.mrf.mxu0
    %v137 = vadd.f32 %v65, %v136
    %v138 = vpop.f32.mrf.mxu0
    %v139 = vpop.f32.mrf.mxu0
    %v140 = vadd.f32 %v65, %v139
    %v141 = vpop.f32.mrf.mxu0
    %142 = vmatprep.mubr.bf16.mxu0 0
    %143 = vmatmul.mubr.bf16.gmra.mxu0 %v100
    %v144 = vpop.f32.mrf.mxu0
    %v145 = vadd.f32 %v65, %v144
    %v146 = vpop.f32.mrf.mxu0
    %v147 = vpop.f32.mrf.mxu0
    %v148 = vadd.f32 %v65, %v147
    %v149 = vpop.f32.mrf.mxu0
    %150 = vdwg.mxu0
    %151 = vadd.xlane.f32.xlu0 %v137
    %v152 = vpop.xlane.xlu0 %151
    %153 = vadd.xlane.f32.xlu0 %v140
    %v154 = vpop.xlane.xlu0 %153
    %155 = vadd.xlane.f32.xlu0 %v145
    %v156 = vpop.xlane.xlu0 %155
    %157 = vadd.xlane.f32.xlu0 %v148
    %v158 = vpop.xlane.xlu0 %157
    %v159 = vmul.f32 %v152, 0.0078125
    %v160 = vmul.f32 %v154, 0.0078125
    %v161 = vmul.f32 %v156, 0.0078125
    %v162 = vmul.f32 %v158, 0.0078125
    %v163 = vsub.f32 %v137, %v159
    %v164 = vsub.f32 %v140, %v160
    %v165 = vsub.f32 %v145, %v161
    %v166 = vsub.f32 %v148, %v162
    %v167 = vmul.f32 %v163, %v163
    %v168 = vmul.f32 %v164, %v164
    %v169 = vmul.f32 %v165, %v165
    %v170 = vmul.f32 %v166, %v166
    %171 = vadd.xlane.f32.xlu0 %v167
    %v172 = vpop.xlane.xlu0 %171
    %173 = vadd.xlane.f32.xlu0 %v168
    %v174 = vpop.xlane.xlu0 %173
    %175 = vadd.xlane.f32.xlu0 %v169
    %v176 = vpop.xlane.xlu0 %175
    %177 = vadd.xlane.f32.xlu0 %v170
    %v178 = vpop.xlane.xlu0 %177
    %v179 = vmul.f32 %v172, 0.0078125
    %v180 = vmul.f32 %v174, 0.0078125
    %v181 = vmul.f32 %v176, 0.0078125
    %v182 = vmul.f32 %v178, 0.0078125
    %v183 = vadd.f32 %v179, 1e-05
    %v184 = vadd.f32 %v180, 1e-05
    %v185 = vadd.f32 %v181, 1e-05
    %v186 = vadd.f32 %v182, 1e-05
    %v187 = vrsqrt.pop %v183
    %v188 = vrsqrt.pop %v184
    %v189 = vrsqrt.pop %v185
    %v190 = vrsqrt.pop %v186
    %v191 = vmul.f32 %v163, %v187
    %v192 = vmul.f32 %v164, %v188
    %v193 = vmul.f32 %v165, %v189
    %v194 = vmul.f32 %v166, %v190
    %v195 = vld [vmem:[%s3] sm:$0x1]
    %v197 = vlaneseq
    %v198 = vshrl.u32 %v197, 7
    %v199 = vsub.s32 0, %v198
    %v200 = vrot.slane %v195, %v199
    %v202 = vmul.f32 %v191, %v200
    %v203 = vmul.f32 %v192, %v200
    %v204 = vmul.f32 %v193, %v200
    %v205 = vmul.f32 %v194, %v200
    %v206 = vld [vmem:[%s4] sm:$0x1]
    %v208 = vlaneseq
    %v209 = vshrl.u32 %v208, 7
    %v210 = vsub.s32 0, %v209
    %v211 = vrot.slane %v206, %v210
    %v213 = vadd.f32 %v202, %v211
    %v214 = vadd.f32 %v203, %v211
    %v215 = vadd.f32 %v204, %v211
    %v216 = vadd.f32 %v205, %v211
    %217 = vst [vmem:[#allocation7] sm:$0xff] %v213
    %218 = vst [vmem:[#allocation7 + $0x8] sm:$0xff] %v214
    %219 = vst [vmem:[#allocation7 + $0x10] sm:$0xff] %v215
    %220 = vst [vmem:[#allocation7 + $0x18] sm:$0xff] %v216
    // Predicated region
    $region30: #{tpu_custom_call.1} parent=1 // pred_check
      _
    $region31: #{tpu_custom_call.1} parent=1 // pred_check_branch
      %222 = sbr.rel (0) target = $region33
    $region32: #{tpu_custom_call.1} parent=1 // pred_region
      %s224 = ssub.s32 512, 512
      %225 = vsyncadd [#allocation4], %s224
      %s226 = sshll.u32 [#allocation7], 4
      %s227 = int_to_ptr.vmem [resolvable:$true] %s226
      %232 = dma.vmem_to_hbm [thread:$0]  %s227, 512, %s5, [#allocation4], 128, 128, 8
    $region33: #{tpu_custom_call.1} parent=1 // pred_fallthru
      _
    // Predicated region
    $region34: #{tpu_custom_call.1} parent=1 // pred_check
      _
    $region35: #{tpu_custom_call.1} parent=1 // pred_check_branch
      %234 = sbr.rel (0) target = $region37
    $region36: #{tpu_custom_call.1} parent=1 // pred_region
      %235 = dma.done [#allocation4], 512
    $region37: #{tpu_custom_call.1} parent=1 // pred_fallthru
      _
    %236 = vsyncpa [#allocation3], 1
    %237 = vsyncpa [#allocation6], 1
    %238 = vsyncpa [#allocation4], 1

</llo_original>
